<compile_context>
chip_gen: v6e
topology: v6e:2x2x1
jax: 0.10.0
libtpu: 0.0.40
codegen_flags: <defaults>
</compile_context>

<pallas_src>
import functools

import jax
import jax.numpy as jnp
from jax import lax
from jax.experimental import pallas as pl
from jax.experimental.pallas import tpu as pltpu


def _fused_transformer_kernel(beta_ref, x_ref, wqkv_ref, o_ref, x_sc, *,
                              embed, compute_dtype):
    """One grid step == one (batch block, layer) pair.

    Grid = (B / B_tile, L); the layer axis is innermost ("arbitrary"), so
    `x_sc` carries the activations of the current batch block across all
    layers in VMEM.
    """
    layer = pl.program_id(1)

    # First layer for this batch block: pull the input slab into f32 scratch.
    @pl.when(layer == 0)
    def _():
        x_sc[...] = x_ref[...].astype(jnp.float32)

    bt, seq, _ = x_sc.shape
    x = x_sc[...]                                        # (Bt, S, E) f32, VMEM-resident

    # Fused QKV projection on the MXU: bf16 inputs, f32 accumulation.
    x2d = x.reshape(bt * seq, embed).astype(compute_dtype)
    w = wqkv_ref[...]                                    # (E, 3E) compute_dtype
    xw = jnp.dot(x2d, w, preferred_element_type=jnp.float32)   # (Bt*S, 3E) f32

    # Fold beta into Q (S*E multiply instead of S*S), then slice q/k/v.
    beta = beta_ref[0]
    q = (xw[:, :embed] * beta).reshape(bt, seq, embed).astype(compute_dtype)
    k = xw[:, embed:2 * embed].reshape(bt, seq, embed).astype(compute_dtype)
    v = xw[:, 2 * embed:].reshape(bt, seq, embed).astype(compute_dtype)

    # Batched Q K^T (contract last dims directly -> no explicit transpose).
    s = lax.dot_general(q, k,
                        dimension_numbers=(((2,), (2,)), ((0,), (0,))),
                        preferred_element_type=jnp.float32)     # (Bt, S, S) f32

    # Numerically stable softmax; the divide goes through the EUP reciprocal.
    m = jnp.max(s, axis=-1, keepdims=True)
    p = jnp.exp(s - m)
    denom = jnp.sum(p, axis=-1, keepdims=True)
    attn = p * pl.reciprocal(denom, approx=True)

    # A V with bf16 operands, f32 accumulation.
    attended = lax.dot_general(attn.astype(compute_dtype), v,
                               dimension_numbers=(((2,), (1,)), ((0,), (0,))),
                               preferred_element_type=jnp.float32)  # (Bt, S, E)

    # Residual + L2 normalize over the embedding dim (EUP rsqrt, no divide).
    y = attended + x
    x_new = y * lax.rsqrt(jnp.sum(y * y, axis=-1, keepdims=True))
    x_sc[...] = x_new

    # Only the final layer's activations leave VMEM.
    @pl.when(layer == pl.num_programs(1) - 1)
    def _():
        o_ref[...] = x_new.astype(o_ref.dtype)


def custom_transformer(x, wqkv_all, beta, *, batch_tile=None,
                       compute_dtype=jnp.bfloat16):
    """Fused CustomTransformer forward.

    x:        (B, S, E)
    wqkv_all: (L, E, 3E) fused [Wq | Wk | Wv], already transposed so layer l
              computes x @ wqkv_all[l].
    beta:     python/jnp scalar (passed via SMEM scalar prefetch).
    """
    B, S, E = x.shape
    L, e_in, e3 = wqkv_all.shape
    assert e_in == E and e3 == 3 * E, "wqkv_all must be (L, E, 3E)"

    if batch_tile is None:
        # Largest divisor of B that is <= 8 (keeps the x/scratch slabs small).
        batch_tile = max(d for d in range(1, min(B, 8) + 1) if B % d == 0)
    assert B % batch_tile == 0, "B must be divisible by batch_tile"
    # TODO(synk): pad the batch dim instead of requiring divisibility.

    beta_arr = jnp.asarray(beta, dtype=jnp.float32).reshape((1,))
    wqkv = wqkv_all.astype(compute_dtype)    # halve weight HBM/DMA traffic (bf16)

    kernel = functools.partial(_fused_transformer_kernel,
                               embed=E, compute_dtype=compute_dtype)

    return pl.pallas_call(
        kernel,
        out_shape=jax.ShapeDtypeStruct((B, S, E), x.dtype),
        grid_spec=pltpu.PrefetchScalarGridSpec(
            num_scalar_prefetch=1,                       # beta -> SMEM
            grid=(B // batch_tile, L),                   # batch blocks outer, layers inner
            in_specs=[
                # x slab for this batch block (loaded once per block; index
                # map is constant in l so it is not re-DMAed across layers).
                pl.BlockSpec((batch_tile, S, E), lambda b, l, beta_ref: (b, 0, 0)),
                # fused Wqkv^T[l], pipelined over the layer axis.
                pl.BlockSpec((None, E, 3 * E), lambda b, l, beta_ref: (l, 0, 0)),
            ],
            out_specs=pl.BlockSpec((batch_tile, S, E), lambda b, l, beta_ref: (b, 0, 0)),
            scratch_shapes=[pltpu.VMEM((batch_tile, S, E), jnp.float32)],
        ),
        compiler_params=pltpu.CompilerParams(
            # batch blocks are independent (megacore-shardable on v7x);
            # the layer axis carries the residual state -> arbitrary.
            dimension_semantics=("parallel", "arbitrary"),
        ),
    )(beta_arr, x, wqkv)


def init_params(key, embed_size, num_layers, dtype=jnp.float32):
    """Deterministic synthetic weights: (L, E, E) each, stored transposed (in, out)."""
    scale = 1.0 / jnp.sqrt(jnp.float32(embed_size))
    wq, wk, wv = [], [], []
    for i in range(num_layers):
        kq, kk, kv = jax.random.split(jax.random.fold_in(key, i), 3)
        wq.append((jax.random.normal(kq, (embed_size, embed_size)) * scale).astype(dtype))
        wk.append((jax.random.normal(kk, (embed_size, embed_size)) * scale).astype(dtype))
        wv.append((jax.random.normal(kv, (embed_size, embed_size)) * scale).astype(dtype))
    return jnp.stack(wq), jnp.stack(wk), jnp.stack(wv)


if __name__ == "__main__":
    B, S, E = 2, 8, 32
    num_layers = 3
    beta = 1.0

    key = jax.random.PRNGKey(0)
    kx, kp = jax.random.split(key)
    x = jax.random.normal(kx, (B, S, E), dtype=jnp.float32)
    wq_all, wk_all, wv_all = init_params(kp, E, num_layers)
    wqkv_all = jnp.concatenate([wq_all, wk_all, wv_all], axis=-1)   # (L, E, 3E)

    out = custom_transformer(x, wqkv_all, beta)
    out = jax.block_until_ready(out)

    # Reference 1: mirrors the kernel's mixed precision (bf16 matmul inputs,
    # f32 accumulation / softmax / norm).
    def ref_mixed(x, wqkv, beta, compute_dtype=jnp.bfloat16):
        E = x.shape[-1]
        w = wqkv.astype(compute_dtype)
        for l in range(wqkv.shape[0]):
            xw = jnp.einsum("bsd,de->bse", x.astype(compute_dtype), w[l],
                            preferred_element_type=jnp.float32)
            q = (xw[..., :E] * beta).astype(compute_dtype)
            k = xw[..., E:2 * E].astype(compute_dtype)
            v = xw[..., 2 * E:].astype(compute_dtype)
            s = jnp.einsum("bqd,bkd->bqk", q, k, preferred_element_type=jnp.float32)
            a = jax.nn.softmax(s, axis=-1)
            att = jnp.einsum("bqk,bkd->bqd", a.astype(compute_dtype), v,
                             preferred_element_type=jnp.float32)
            y = att + x
            x = y / jnp.linalg.norm(y, axis=-1, keepdims=True)
        return x

    # Reference 2: full f32 semantics of the original PyTorch module.
    def ref_f32(x, wq, wk, wv, beta):
        for l in range(wq.shape[0]):
            q = x @ wq[l]
            k = x @ wk[l]
            v = x @ wv[l]
            s = beta * jnp.einsum("bqd,bkd->bqk", q, k)
            a = jax.nn.softmax(s, axis=-1)
            y = jnp.einsum("bqk,bkd->bqd", a, v) + x
            x = y / jnp.linalg.norm(y, axis=-1, keepdims=True)
        return x

    expected_mixed = ref_mixed(x, wqkv_all, beta)
    expected_f32 = ref_f32(x, wq_all, wk_all, wv_all, beta)

    assert out.shape == (B, S, E)
    assert bool(jnp.all(jnp.isfinite(out)))
    err_mixed = float(jnp.max(jnp.abs(out - expected_mixed)))
    err_f32 = float(jnp.max(jnp.abs(out - expected_f32)))
    assert err_mixed < 2e-2, f"max abs err vs bf16-matmul reference = {err_mixed}"
    assert err_f32 < 1e-1, f"max abs err vs f32 reference = {err_f32}"
    print("KERNEL_OK")
</pallas_src>

<mosaic_0001>
module attributes {stable_mosaic.version = 11 : i64} {
  func.func @_fused_transformer_kernel(%arg0: i32, %arg1: i32, %arg2: memref<1xf32, #tpu.memory_space<smem>>, %arg3: memref<2x8x32xf32, #tpu.memory_space<vmem>>, %arg4: memref<1x32x96xbf16, #tpu.memory_space<vmem>>, %arg5: memref<2x8x32xf32, #tpu.memory_space<vmem>>, %arg6: memref<2x8x32xf32, #tpu.memory_space<vmem>>) attributes {dimension_semantics = [#tpu.dimension_semantics<parallel>, #tpu.dimension_semantics<arbitrary>], iteration_bounds = array<i64: 1, 3>, scalar_prefetch = 1 : i64, scratch_operands = 1 : i64, tpu.core_type = #tpu.core_type<tc>, window_params = [{transform_indices = @transform_0, window_bounds = array<i64: 2, 8, 32>}, {transform_indices = @transform_1, window_bounds = array<i64: 1, 32, 96>}, {transform_indices = @transform_2, window_bounds = array<i64: 2, 8, 32>}]} {
    %c0_i32 = arith.constant 0 : i32
    %0 = arith.cmpi eq, %arg1, %c0_i32 : i32
    %1 = arith.extui %0 : i1 to i32
    %c0_i32_0 = arith.constant 0 : i32
    %2 = arith.cmpi ne, %1, %c0_i32_0 : i32
    scf.if %2 {
      %c0_16 = arith.constant 0 : index
      %c0_17 = arith.constant 0 : index
      %c0_18 = arith.constant 0 : index
      %45 = vector.load %arg3[%c0_16, %c0_17, %c0_18] : memref<2x8x32xf32, #tpu.memory_space<vmem>>, vector<2x8x32xf32>
      %c0_19 = arith.constant 0 : index
      %c0_20 = arith.constant 0 : index
      %c0_21 = arith.constant 0 : index
      %46 = vector.load %arg6[%c0_19, %c0_20, %c0_21] : memref<2x8x32xf32, #tpu.memory_space<vmem>>, vector<2x8x32xf32>
      tpu.vector_store %arg6[%c0_19, %c0_20, %c0_21], %45 {strides = array<i32>} : memref<2x8x32xf32, #tpu.memory_space<vmem>>, vector<2x8x32xf32>,
    } else {
    }
    %c0 = arith.constant 0 : index
    %c0_1 = arith.constant 0 : index
    %c0_2 = arith.constant 0 : index
    %3 = vector.load %arg6[%c0, %c0_1, %c0_2] : memref<2x8x32xf32, #tpu.memory_space<vmem>>, vector<2x8x32xf32>
    %4 = vector.shape_cast %3 : vector<2x8x32xf32> to vector<16x32xf32>
    %5 = arith.truncf %4 : vector<16x32xf32> to vector<16x32xbf16>
    %c0_3 = arith.constant 0 : index
    %c0_4 = arith.constant 0 : index
    %c0_5 = arith.constant 0 : index
    %6 = vector.load %arg4[%c0_3, %c0_4, %c0_5] : memref<1x32x96xbf16, #tpu.memory_space<vmem>>, vector<1x32x96xbf16>
    %7 = vector.shape_cast %6 : vector<1x32x96xbf16> to vector<32x96xbf16>
    %cst = arith.constant dense<0.000000e+00> : vector<16x96xf32>
    %8 = tpu.matmul %5, %7, %cst {dimension_numbers = #tpu.dot_dimension_numbers<[1], [0], [0], [1], [0, 0, 1, 1], [], []>} : vector<16x32xbf16>, vector<32x96xbf16>, vector<16x96xf32> -> vector<16x96xf32>
    %c0_6 = arith.constant 0 : index
    %9 = memref.load %arg2[%c0_6] : memref<1xf32, #tpu.memory_space<smem>>
    %10 = vector.extract_strided_slice %8 {offsets = [0, 0], sizes = [16, 32], strides = [1, 1]} : vector<16x96xf32> to vector<16x32xf32>
    %11 = vector.broadcast %9 : f32 to vector<16x32xf32>
    %12 = arith.mulf %10, %11 : vector<16x32xf32>
    %13 = vector.shape_cast %12 : vector<16x32xf32> to vector<2x8x32xf32>
    %14 = arith.truncf %13 : vector<2x8x32xf32> to vector<2x8x32xbf16>
    %15 = vector.extract_strided_slice %8 {offsets = [0, 32], sizes = [16, 32], strides = [1, 1]} : vector<16x96xf32> to vector<16x32xf32>
    %16 = vector.shape_cast %15 : vector<16x32xf32> to vector<2x8x32xf32>
    %17 = arith.truncf %16 : vector<2x8x32xf32> to vector<2x8x32xbf16>
    %18 = vector.extract_strided_slice %8 {offsets = [0, 64], sizes = [16, 32], strides = [1, 1]} : vector<16x96xf32> to vector<16x32xf32>
    %19 = vector.shape_cast %18 : vector<16x32xf32> to vector<2x8x32xf32>
    %20 = arith.truncf %19 : vector<2x8x32xf32> to vector<2x8x32xbf16>
    %cst_7 = arith.constant dense<0.000000e+00> : vector<2x8x8xf32>
    %21 = tpu.matmul %14, %17, %cst_7 {dimension_numbers = #tpu.dot_dimension_numbers<[2], [2], [1], [1], [0, 0, 0, 1, 1, 1], [0], [0]>} : vector<2x8x32xbf16>, vector<2x8x32xbf16>, vector<2x8x8xf32> -> vector<2x8x8xf32>
    %cst_8 = arith.constant dense<0xFF800000> : vector<2x8xf32>
    %22 = vector.multi_reduction <maximumf>, %21, %cst_8 [2] : vector<2x8x8xf32> to vector<2x8xf32>
    %23 = vector.shape_cast %22 : vector<2x8xf32> to vector<2x8x1xf32>
    %24 = vector.broadcast %23 : vector<2x8x1xf32> to vector<2x8x8xf32>
    %25 = arith.subf %21, %24 : vector<2x8x8xf32>
    %26 = math.exp %25 : vector<2x8x8xf32>
    %cst_9 = arith.constant dense<0.000000e+00> : vector<2x8xf32>
    %27 = vector.multi_reduction <add>, %26, %cst_9 [2] : vector<2x8x8xf32> to vector<2x8xf32>
    %28 = vector.shape_cast %27 : vector<2x8xf32> to vector<2x8x1xf32>
    %29 = tpu.reciprocal %28 {approx = true} : vector<2x8x1xf32> -> vector<2x8x1xf32>
    %30 = vector.broadcast %29 : vector<2x8x1xf32> to vector<2x8x8xf32>
    %31 = arith.mulf %26, %30 : vector<2x8x8xf32>
    %32 = arith.truncf %31 : vector<2x8x8xf32> to vector<2x8x8xbf16>
    %cst_10 = arith.constant dense<0.000000e+00> : vector<2x8x32xf32>
    %33 = tpu.matmul %32, %20, %cst_10 {dimension_numbers = #tpu.dot_dimension_numbers<[2], [1], [1], [2], [0, 0, 0, 1, 1, 2], [0], [0]>} : vector<2x8x8xbf16>, vector<2x8x32xbf16>, vector<2x8x32xf32> -> vector<2x8x32xf32>
    %34 = arith.addf %33, %3 : vector<2x8x32xf32>
    %35 = arith.mulf %34, %34 : vector<2x8x32xf32>
    %cst_11 = arith.constant dense<0.000000e+00> : vector<2x8xf32>
    %36 = vector.multi_reduction <add>, %35, %cst_11 [2] : vector<2x8x32xf32> to vector<2x8xf32>
    %37 = vector.shape_cast %36 : vector<2x8xf32> to vector<2x8x1xf32>
    %38 = math.rsqrt %37 : vector<2x8x1xf32>
    %39 = vector.broadcast %38 : vector<2x8x1xf32> to vector<2x8x32xf32>
    %40 = arith.mulf %34, %39 : vector<2x8x32xf32>
    %c0_12 = arith.constant 0 : index
    %c0_13 = arith.constant 0 : index
    %c0_14 = arith.constant 0 : index
    %41 = vector.load %arg6[%c0_12, %c0_13, %c0_14] : memref<2x8x32xf32, #tpu.memory_space<vmem>>, vector<2x8x32xf32>
    tpu.vector_store %arg6[%c0_12, %c0_13, %c0_14], %40 {strides = array<i32>} : memref<2x8x32xf32, #tpu.memory_space<vmem>>, vector<2x8x32xf32>,
    %c2_i32 = arith.constant 2 : i32
    %42 = arith.cmpi eq, %arg1, %c2_i32 : i32
    %43 = arith.extui %42 : i1 to i32
    %c0_i32_15 = arith.constant 0 : i32
    %44 = arith.cmpi ne, %43, %c0_i32_15 : i32
    scf.if %44 {
      %c0_16 = arith.constant 0 : index
      %c0_17 = arith.constant 0 : index
      %c0_18 = arith.constant 0 : index
      %45 = vector.load %arg5[%c0_16, %c0_17, %c0_18] : memref<2x8x32xf32, #tpu.memory_space<vmem>>, vector<2x8x32xf32>
      tpu.vector_store %arg5[%c0_16, %c0_17, %c0_18], %40 {strides = array<i32>} : memref<2x8x32xf32, #tpu.memory_space<vmem>>, vector<2x8x32xf32>,
    } else {
    }
    return
  }
  func.func @transform_0(%arg0: i32, %arg1: i32, %arg2: memref<1xf32, #tpu.memory_space<smem>>) -> (i32, i32, i32) {
    %c0_i32 = arith.constant 0 : i32
    %c0_i32_0 = arith.constant 0 : i32
    %c0_i32_1 = arith.constant 0 : i32
    return %arg0, %c0_i32, %c0_i32_0 : i32, i32, i32
  }
  func.func @transform_1(%arg0: i32, %arg1: i32, %arg2: memref<1xf32, #tpu.memory_space<smem>>) -> (i32, i32, i32) {
    %c0_i32 = arith.constant 0 : i32
    %c0_i32_0 = arith.constant 0 : i32
    %c0_i32_1 = arith.constant 0 : i32
    return %arg1, %c0_i32, %c0_i32_0 : i32, i32, i32
  }
  func.func @transform_2(%arg0: i32, %arg1: i32, %arg2: memref<1xf32, #tpu.memory_space<smem>>) -> (i32, i32, i32) {
    %c0_i32 = arith.constant 0 : i32
    %c0_i32_0 = arith.constant 0 : i32
    %c0_i32_1 = arith.constant 0 : i32
    return %arg0, %c0_i32, %c0_i32_0 : i32, i32, i32
  }
}

</mosaic_0001>

<llo_original>
// kernel: tpu_custom_call.1
$region0: #{tpu_custom_call.1}
  #allocation0 [shape = 'u32[]', space=smem, size = 0x4, offset = 0x4, fixed_abs, tag = 'smem constant byte address 0x4 - core index']
  #allocation1 [shape = 'u32[144,128]{1,0:T(1,128)}', space=vmem, size = 0x12000, scoped, tag = 'internal scratch']
  #allocation2 [shape = 'f32[2,8,32]{2,1,0:T(8,128)}', space=vmem, size = 0x2000, scoped, tag = 'scratch operand']
  #allocation3 [shape = 's32[1]{0}', space=sflag, size = 0x4, scoped, tag = 'scoped memory for tpu_custom_call.1']
  #allocation4 [shape = 'f32[1]{0:T(128)S(6)}', space=smem, size = 0x200, scoped, tag = 'prefetched SMEM operand 0']
  %s0 = inlined_call_operand.<no memory space> [shape: f32[1], index: 0, kind: input, shape index: {}]
  %s1 = inlined_call_operand.hbm [shape: f32[2,8,32], index: 1, kind: input, shape index: {}]
  %s2 = inlined_call_operand.hbm [shape: bf16[3,32,96], index: 2, kind: input, shape index: {}]
  %s3 = inlined_call_operand.hbm [shape: f32[2,8,32], index: 3, kind: output, shape index: {}]
  %s4 = sld [smem:[#allocation0]]
  $region57: #{tpu_custom_call.1} parent=0
    _
  %s6 = ssub.s32 1, %s4
  %s7 = scalar_select 0, %s6, %s4
  %8 = sst [smem:[#allocation4]] %s0
  $region1: #{tpu_custom_call.1} parent=0
    #allocation5 [shape = 'u8[8192]{0}', space=vmem, size = 0x2000, scoped, tag = 'input window, operand 1, single buffered']
    #allocation6 [shape = 's32[2]{0}', space=sflag, size = 0x8, scoped, tag = 'scoped memory for tpu_custom_call.1']
    #allocation7 [shape = 's32[2]{0}', space=sflag, size = 0x8, scoped, tag = 'scoped memory for tpu_custom_call.1']
    #allocation8 [shape = 'u8[16384]{0}', space=vmem, size = 0x4000, scoped, tag = 'input window, operand 2']
    #allocation9 [shape = 's32[2]{0}', space=sflag, size = 0x8, scoped, tag = 'scoped memory for tpu_custom_call.1']
    #allocation10 [shape = 'u8[8192]{0}', space=vmem, size = 0x2000, scoped, tag = 'output window, operand 0, single buffered']
    %9 = vsyncpa [#allocation6], 0
    %10 = vsyncpa [#allocation9], 0
    %s11 = scalar_lea.sflag [#allocation9], 1
    %12 = vsyncpa %s11, 0
    %13 = vsyncpa [#allocation7], 0
    loop: start=0, step=1, limit=5
    $region2: #{tpu_custom_call.1} parent=1 // loop_pre_header
      _
    $region3: #{tpu_custom_call.1} parent=1 // loop_header
      %s15 = sphi 0, %s19
      %p16 = scmp.ge.s32.totalorder %s15, 5
      %s22 = sphi 0, %s34
      %s23 = sphi 0, %s30
      %s24 = sphi 0, %s22
      %s25 = sphi 0, %s23
      %s26 = sphi 0, %s24
      %s27 = sphi 0, %s25
      %s37 = sphi 0, %s39
      %s40 = sphi 0, %s37
      %s41 = sphi 0, %s40
      %s57 = sphi 0, %s41
      %s63 = sphi 0, %s65
      %s66 = sphi 0, %s63
      %s67 = sphi 0, %s66
      %s83 = sphi 0, %s67
      %s89 = sphi 0, %s91
      %s92 = sphi 0, %s89
      %s93 = sphi 0, %s92
      %s109 = sphi 0, %s93
    $region4: #{tpu_custom_call.1} parent=1 // loop_header_branch
      %18 = sbr.rel (%p16) target = $region8
    $region5: #{tpu_custom_call.1} parent=1 // loop_body
      %s20 = ssub.s32 %s15, 1
      %s21 = ssub.s32 %s15, 2
      %s28 = sadd.s32 1, %s23
      %p29 = scmp.ge.s32.totalorder %s28, 3
      %s30 = scalar_select %p29, 0, %s28
      %s31 = sadd.s32 1, %s22
      %s32 = scalar_select %p29, %s31, %s22
      %p33 = scmp.ge.s32.totalorder %s32, 1
      %s34 = scalar_select %p33, 0, %s32
      %s35 = ssub.s32 %s22, %s34
      %p36 = scmp.eq.s32.totalorder %s35, 0
      %s38 = sadd.s32 %s37, 1
      %s39 = scalar_select %p36, %s37, %s38
      %p42 = pneg %p36
      %p43 = scmp.eq.s32.totalorder %s15, 2
      %p44 = por %p42, %p43
      %p45 = scmp.ne.s32.totalorder %s37, %s40
      %p46 = scmp.eq.s32.totalorder %s15, 0
      %p47 = por %p45, %p46
      %p48 = scmp.ne.s32.totalorder %s37, %s40
      %p49 = scmp.eq.s32.totalorder %s20, 2
      %p50 = por %p48, %p49
      %p51 = scmp.ne.s32.totalorder %s40, %s41
      %p52 = scmp.eq.s32.totalorder %s20, 0
      %p53 = por %p51, %p52
      %p54 = scmp.ne.s32.totalorder %s40, %s41
      %p55 = scmp.eq.s32.totalorder %s21, 2
      %p56 = por %p54, %p55
      %p58 = scmp.ne.s32.totalorder %s41, %s57
      %p59 = scmp.eq.s32.totalorder %s21, 0
      %p60 = por %p58, %p59
      %s61 = ssub.s32 %s23, %s30
      %p62 = scmp.eq.s32.totalorder %s61, 0
      %s64 = sadd.s32 %s63, 1
      %s65 = scalar_select %p62, %s63, %s64
      %p68 = pneg %p62
      %p69 = scmp.eq.s32.totalorder %s15, 2
      %p70 = por %p68, %p69
      %p71 = scmp.ne.s32.totalorder %s63, %s66
      %p72 = scmp.eq.s32.totalorder %s15, 0
      %p73 = por %p71, %p72
      %p74 = scmp.ne.s32.totalorder %s63, %s66
      %p75 = scmp.eq.s32.totalorder %s20, 2
      %p76 = por %p74, %p75
      %p77 = scmp.ne.s32.totalorder %s66, %s67
      %p78 = scmp.eq.s32.totalorder %s20, 0
      %p79 = por %p77, %p78
      %p80 = scmp.ne.s32.totalorder %s66, %s67
      %p81 = scmp.eq.s32.totalorder %s21, 2
      %p82 = por %p80, %p81
      %p84 = scmp.ne.s32.totalorder %s67, %s83
      %p85 = scmp.eq.s32.totalorder %s21, 0
      %p86 = por %p84, %p85
      %s87 = ssub.s32 %s22, %s34
      %p88 = scmp.eq.s32.totalorder %s87, 0
      %s90 = sadd.s32 %s89, 1
      %s91 = scalar_select %p88, %s89, %s90
      %p94 = pneg %p88
      %p95 = scmp.eq.s32.totalorder %s15, 2
      %p96 = por %p94, %p95
      %p97 = scmp.ne.s32.totalorder %s89, %s92
      %p98 = scmp.eq.s32.totalorder %s15, 0
      %p99 = por %p97, %p98
      %p100 = scmp.ne.s32.totalorder %s89, %s92
      %p101 = scmp.eq.s32.totalorder %s20, 2
      %p102 = por %p100, %p101
      %p103 = scmp.ne.s32.totalorder %s92, %s93
      %p104 = scmp.eq.s32.totalorder %s20, 0
      %p105 = por %p103, %p104
      %p106 = scmp.ne.s32.totalorder %s92, %s93
      %p107 = scmp.eq.s32.totalorder %s21, 2
      %p108 = por %p106, %p107
      %p110 = scmp.ne.s32.totalorder %s93, %s109
      %p111 = scmp.eq.s32.totalorder %s21, 0
      %p112 = por %p110, %p111
      %p113 = scmp.le.s32.totalorder 1, %s15
      %p114 = scmp.lt.s32.totalorder %s15, 4
      %p115 = pnand %p113, %p114
      %p116 = pneg %p115
      // Predicated region
      $region9: #{tpu_custom_call.1} parent=5 // pred_check
        _
      $region10: #{tpu_custom_call.1} parent=5 // pred_check_branch
        %118 = sbr.rel (%p115) target = $region12
      $region11: #{tpu_custom_call.1} parent=5 // pred_region
        %s119 = ssub.s32 %s15, 1
        // Predicated region
        $region13: #{tpu_custom_call.1} parent=11 // pred_check
          %p120 = pneg %p53
        $region14: #{tpu_custom_call.1} parent=11 // pred_check_branch
          %122 = sbr.rel (%p120) target = $region16
        $region15: #{tpu_custom_call.1} parent=11 // pred_region
          %s123 = smul.u32 2, %s24
          %s125 = ssub.s32 256, 256
          %126 = vsyncadd [#allocation6], %s125
          %s127 = smul.addr %s123, 128
          %s128 = scalar_lea.hbm %s1, %s127
          %s129 = sshll.u32 [#allocation5], 4
          %s130 = int_to_ptr.vmem [resolvable:$true] %s129
          %135 = dma.hbm_to_vmem [thread:$0]  %s128, 256, %s130, [#allocation6], 128, 128, 8
        $region16: #{tpu_custom_call.1} parent=11 // pred_fallthru
          _
      $region12: #{tpu_custom_call.1} parent=5 // pred_fallthru
        _
      %p136 = scmp.lt.s32.totalorder %s15, 3
      // Predicated region
      $region17: #{tpu_custom_call.1} parent=5 // pred_check
        %p137 = pneg %p136
      $region18: #{tpu_custom_call.1} parent=5 // pred_check_branch
        %139 = sbr.rel (%p137) target = $region20
      $region19: #{tpu_custom_call.1} parent=5 // pred_region
        // Predicated region
        $region21: #{tpu_custom_call.1} parent=19 // pred_check
          %p140 = pneg %p73
        $region22: #{tpu_custom_call.1} parent=19 // pred_check_branch
          %142 = sbr.rel (%p140) target = $region24
        $region23: #{tpu_custom_call.1} parent=19 // pred_region
          %s143 = sand.u32 %s63, 1
          %s144 = scalar_lea.sflag [#allocation9], %s143
          %s145 = sand.u32 %s63, 1
          %s146 = smul.addr %s145, 16
          %s147 = scalar_lea.vmem [#allocation8], %s146
          %s149 = ssub.s32 256, 256
          %150 = vsyncadd %s144, %s149
          %s151 = smul.addr %s23, 4
          %s152 = smul.addr %s151, 64
          %s153 = scalar_lea.hbm %s2, %s152
          %s154 = sshll.u32 %s147, 4
          %s155 = int_to_ptr.vmem [resolvable:$true] %s154
          %160 = dma.hbm_to_vmem [thread:$0]  %s153, 256, %s155, %s144, 64, 64, 4
        $region24: #{tpu_custom_call.1} parent=19 // pred_fallthru
          _
      $region20: #{tpu_custom_call.1} parent=5 // pred_fallthru
        _
      %p161 = scmp.le.s32.totalorder 1, %s15
      %p162 = scmp.lt.s32.totalorder %s15, 4
      %p163 = pnand %p161, %p162
      %p164 = pneg %p163
      // Predicated region
      $region25: #{tpu_custom_call.1} parent=5 // pred_check
        _
      $region26: #{tpu_custom_call.1} parent=5 // pred_check_branch
        %166 = sbr.rel (%p163) target = $region28
      $region27: #{tpu_custom_call.1} parent=5 // pred_region
        %s167 = ssub.s32 %s15, 1
        // Predicated region
        $region29: #{tpu_custom_call.1} parent=27 // pred_check
          %p168 = pneg %p53
        $region30: #{tpu_custom_call.1} parent=27 // pred_check_branch
          %170 = sbr.rel (%p168) target = $region32
        $region31: #{tpu_custom_call.1} parent=27 // pred_region
          %171 = dma.done [#allocation6], 256
        $region32: #{tpu_custom_call.1} parent=27 // pred_fallthru
          _
        %s172 = sand.u32 %s66, 1
        %s173 = scalar_lea.sflag [#allocation9], %s172
        %s174 = sand.u32 %s66, 1
        %s175 = smul.addr %s174, 16
        %s176 = scalar_lea.vmem [#allocation8], %s175
        // Predicated region
        $region33: #{tpu_custom_call.1} parent=27 // pred_check
          %p177 = pneg %p79
        $region34: #{tpu_custom_call.1} parent=27 // pred_check_branch
          %179 = sbr.rel (%p177) target = $region36
        $region35: #{tpu_custom_call.1} parent=27 // pred_region
          %180 = dma.done %s173, 256
        $region36: #{tpu_custom_call.1} parent=27 // pred_fallthru
          _
        %p181 = pneg %p53
        %p182 = pneg %p50
        %s183 = sand.u32 %s66, 1
        %s184 = scalar_lea.sflag [#allocation9], %s183
        %s185 = sand.u32 %s66, 1
        %s186 = smul.addr %s185, 16
        %s187 = scalar_lea.vmem [#allocation8], %s186
        %p188 = pneg %p79
        %p189 = pneg %p76
        %p190 = pneg %p105
        %p191 = pneg %p102
        %s192 = smul.u32 2, %s24
        %s193 = smul.u32 2, %s24
        %p195 = scmp.eq.s32.totalorder %s25, 0
        // Predicated region
        $region37: #{tpu_custom_call.1} parent=27 // pred_check
          %p196 = pneg %p195
        $region38: #{tpu_custom_call.1} parent=27 // pred_check_branch
          %198 = sbr.rel (%p196) target = $region40
        $region39: #{tpu_custom_call.1} parent=27 // pred_region
          %v199 = vld [vmem:[#allocation5] sm:$0xff]
          %v200 = vld [vmem:[#allocation5 + $0x8] sm:$0xff]
          %vm201 = vcmask 261120
          %202 = vst.msk [vmem:[#allocation2] sm:$0xff] %vm201, %v199
          %203 = vst.msk [vmem:[#allocation2 + $0x8] sm:$0xff] %vm201, %v200
        $region40: #{tpu_custom_call.1} parent=27 // pred_fallthru
          _
        %v204 = vld [vmem:[#allocation2] sm:$0xff]
        %v205 = vld [vmem:[#allocation2 + $0x8] sm:$0xff]
        %v206 = vpack.c.bf16 %v205, %v204
        %v207 = vld [vmem:[%s176] sm:$0xf]
        %v208 = vld [vmem:[%s176 + $0x4] sm:$0xf]
        %v209 = vld [vmem:[%s176 + $0x8] sm:$0xf]
        %v210 = vld [vmem:[%s176 + $0xc] sm:$0xf]
        %v215 = vunpack.c.l.b16 %v207
        %v216 = vunpack.c.l.b16 %v208
        %v217 = vunpack.c.l.b16 %v209
        %v218 = vunpack.c.l.b16 %v210
        %v219 = vpack.c.b16 %v216, %v215
        %v220 = vpack.c.b16 %v218, %v217
        %vm223 = vcmask 261120
        %v225 = vsel %vm223, %v206, 0
        %227 = vmatprep.subr.bf16.mxu0 0
        %228 = vmatpush1.bf16.msra.mxu0 0
        %229 = vmatprep.subr.bf16.mxu0 0
        %230 = vmatpush1.bf16.msra.mxu0 0
        %231 = vmatprep.subr.bf16.mxu0 0
        %232 = vmatpush1.bf16.msra.mxu0 0
        %233 = vmatprep.subr.bf16.mxu0 0
        %234 = vmatpush1.bf16.msra.mxu0 0
        %235 = vmatprep.subr.bf16.mxu0 0
        %236 = vmatpush1.bf16.msra.mxu0 0
        %237 = vmatprep.subr.bf16.mxu0 0
        %238 = vmatpush1.bf16.msra.mxu0 0
        %239 = vmatprep.subr.bf16.mxu0 0
        %240 = vmatpush1.bf16.msra.mxu0 %v220
        %241 = vmatprep.subr.bf16.mxu0 0
        %242 = vmatpush1.bf16.msra.mxu0 %v219
        %243 = vmatprep.subr.bf16.mxu0 0
        %244 = vmatpush2.bf16.msra.mxu0 0
        %245 = vmatprep.subr.bf16.mxu0 0
        %246 = vmatpush2.bf16.msra.mxu0 0
        %247 = vmatprep.subr.bf16.mxu0 0
        %248 = vmatpush2.bf16.msra.mxu0 0
        %249 = vmatprep.subr.bf16.mxu0 0
        %250 = vmatpush2.bf16.msra.mxu0 0
        %251 = vmatprep.subr.bf16.mxu0 0
        %252 = vmatpush2.bf16.msra.mxu0 0
        %253 = vmatprep.subr.bf16.mxu0 0
        %254 = vmatpush2.bf16.msra.mxu0 0
        %255 = vmatprep.subr.bf16.mxu0 0
        %256 = vmatpush2.bf16.msra.mxu0 0
        %257 = vmatprep.subr.bf16.mxu0 0
        %258 = vmatpush2.bf16.msra.mxu0 0
        %259 = vmatprep.mubr.bf16.mxu0 0
        %260 = vmatmul.mubr.bf16.gmra.mxu0 %v225
        %v261 = vpop.f32.mrf.mxu0
        %v262 = vadd.f32 0.0, %v261
        %v263 = vpop.f32.mrf.mxu0
        %v264 = vpop.f32.mrf.mxu0
        %v265 = vadd.f32 0.0, %v264
        %v266 = vpop.f32.mrf.mxu0
        %267 = vdwg.mxu0
        %s268 = sld [smem:[#allocation4]]
        %v269 = vstv %s268
        %v270 = vmul.f32 %v262, %v269
        %v271 = vmul.f32 %v265, %v269
        %v272 = vpack.c.bf16 %v270, %v270
        %v273 = vpack.c.bf16 %v271, %v271
        %v274 = vpack.c.bf16 %v262, %v262
        %v275 = vpack.c.bf16 %v265, %v265
        %277 = vrot.lane.b32.xlu0 %v274, 96
        %v278 = vpop.permute.xlu0 %277
        %v280 = vsel %vm223, %v272, 0
        %v283 = vsel %vm223, %v278, 0
        %285 = vmatprep.subr.bf16.mxu0 0
        %286 = vmatpush1.bf16.xpose.msra.mxu0 0
        %287 = vmatprep.subr.bf16.mxu0 0
        %288 = vmatpush1.bf16.xpose.msra.mxu0 0
        %289 = vmatprep.subr.bf16.mxu0 0
        %290 = vmatpush1.bf16.xpose.msra.mxu0 0
        %291 = vmatprep.subr.bf16.mxu0 0
        %292 = vmatpush1.bf16.xpose.msra.mxu0 0
        %293 = vmatprep.subr.bf16.mxu0 0
        %294 = vmatpush1.bf16.xpose.msra.mxu0 0
        %295 = vmatprep.subr.bf16.mxu0 0
        %296 = vmatpush1.bf16.xpose.msra.mxu0 0
        %297 = vmatprep.subr.bf16.mxu0 0
        %298 = vmatpush1.bf16.xpose.msra.mxu0 0
        %299 = vmatprep.subr.bf16.mxu0 0
        %300 = vmatpush1.bf16.xpose.msra.mxu0 %v283
        %301 = vmatprep.subr.bf16.mxu0 0
        %302 = vmatpush2.bf16.xpose.msra.mxu0 0
        %303 = vmatprep.subr.bf16.mxu0 0
        %304 = vmatpush2.bf16.xpose.msra.mxu0 0
        %305 = vmatprep.subr.bf16.mxu0 0
        %306 = vmatpush2.bf16.xpose.msra.mxu0 0
        %307 = vmatprep.subr.bf16.mxu0 0
        %308 = vmatpush2.bf16.xpose.msra.mxu0 0
        %309 = vmatprep.subr.bf16.mxu0 0
        %310 = vmatpush2.bf16.xpose.msra.mxu0 0
        %311 = vmatprep.subr.bf16.mxu0 0
        %312 = vmatpush2.bf16.xpose.msra.mxu0 0
        %313 = vmatprep.subr.bf16.mxu0 0
        %314 = vmatpush2.bf16.xpose.msra.mxu0 0
        %315 = vmatprep.subr.bf16.mxu0 0
        %316 = vmatpush2.bf16.xpose.msra.mxu0 0
        %317 = vmatprep.mubr.bf16.mxu0 0
        %318 = vmatmul.mubr.bf16.gmra.mxu0 %v280
        %v319 = vpop.f32.mrf.mxu0
        %v320 = vadd.f32 0.0, %v319
        %v321 = vpop.f32.mrf.mxu0
        %v322 = vpop.f32.mrf.mxu0
        %v323 = vpop.f32.mrf.mxu0
        %324 = vdwg.mxu0
        %326 = vrot.lane.b32.xlu0 %v275, 96
        %v327 = vpop.permute.xlu0 %326
        %v329 = vsel %vm223, %v273, 0
        %v332 = vsel %vm223, %v327, 0
        %334 = vmatprep.subr.bf16.mxu0 0
        %335 = vmatpush1.bf16.xpose.msra.mxu0 0
        %336 = vmatprep.subr.bf16.mxu0 0
        %337 = vmatpush1.bf16.xpose.msra.mxu0 0
        %338 = vmatprep.subr.bf16.mxu0 0
        %339 = vmatpush1.bf16.xpose.msra.mxu0 0
        %340 = vmatprep.subr.bf16.mxu0 0
        %341 = vmatpush1.bf16.xpose.msra.mxu0 0
        %342 = vmatprep.subr.bf16.mxu0 0
        %343 = vmatpush1.bf16.xpose.msra.mxu0 0
        %344 = vmatprep.subr.bf16.mxu0 0
        %345 = vmatpush1.bf16.xpose.msra.mxu0 0
        %346 = vmatprep.subr.bf16.mxu0 0
        %347 = vmatpush1.bf16.xpose.msra.mxu0 0
        %348 = vmatprep.subr.bf16.mxu0 0
        %349 = vmatpush1.bf16.xpose.msra.mxu0 %v332
        %350 = vmatprep.subr.bf16.mxu0 0
        %351 = vmatpush2.bf16.xpose.msra.mxu0 0
        %352 = vmatprep.subr.bf16.mxu0 0
        %353 = vmatpush2.bf16.xpose.msra.mxu0 0
        %354 = vmatprep.subr.bf16.mxu0 0
        %355 = vmatpush2.bf16.xpose.msra.mxu0 0
        %356 = vmatprep.subr.bf16.mxu0 0
        %357 = vmatpush2.bf16.xpose.msra.mxu0 0
        %358 = vmatprep.subr.bf16.mxu0 0
        %359 = vmatpush2.bf16.xpose.msra.mxu0 0
        %360 = vmatprep.subr.bf16.mxu0 0
        %361 = vmatpush2.bf16.xpose.msra.mxu0 0
        %362 = vmatprep.subr.bf16.mxu0 0
        %363 = vmatpush2.bf16.xpose.msra.mxu0 0
        %364 = vmatprep.subr.bf16.mxu0 0
        %365 = vmatpush2.bf16.xpose.msra.mxu0 0
        %366 = vmatprep.mubr.bf16.mxu0 0
        %367 = vmatmul.mubr.bf16.gmra.mxu0 %v329
        %v368 = vpop.f32.mrf.mxu0
        %v369 = vadd.f32 0.0, %v368
        %v370 = vpop.f32.mrf.mxu0
        %v371 = vpop.f32.mrf.mxu0
        %v372 = vpop.f32.mrf.mxu0
        %373 = vdwg.mxu0
        %vm374 = vcmask 64512
        %v375 = vsel %vm374, %v320, -inf
        %376 = vmax.xlane.f32.xlu0 %v375
        %v377 = vpop.xlane.xlu0 %376
        %v378 = vsel %vm374, %v369, -inf
        %379 = vmax.xlane.f32.xlu0 %v378
        %v380 = vpop.xlane.xlu0 %379
        %v381 = vsub.f32 %v320, %v377
        %v382 = vsub.f32 %v369, %v380
        %v383 = vmul.f32 %v381, 1.442695
        %v384 = vpow.pop %v383
        %v385 = vmul.f32 %v382, 1.442695
        %v386 = vpow.pop %v385
        %v387 = vsel %vm374, %v384, 0.0
        %388 = vadd.xlane.f32.xlu0 %v387
        %v389 = vpop.xlane.xlu0 %388
        %v390 = vsel %vm374, %v386, 0.0
        %391 = vadd.xlane.f32.xlu0 %v390
        %v392 = vpop.xlane.xlu0 %391
        %v393 = vrcp.pop %v389
        %v394 = vrcp.pop %v392
        %v395 = vmul.f32 %v384, %v393
        %v396 = vmul.f32 %v386, %v394
        %v397 = vpack.c.bf16 %v395, %v395
        %v398 = vpack.c.bf16 %v396, %v396
        %399 = vrot.lane.b32.xlu0 %v274, 64
        %v400 = vpop.permute.xlu0 %399
        %v402 = vsel %vm374, %v397, 0
        %vm404 = vcmask 1043456
        %v406 = vsel %vm404, %v400, 0
        %408 = vmatprep.subr.bf16.mxu0 0
        %409 = vmatpush1.bf16.msra.mxu0 0
        %410 = vmatprep.subr.bf16.mxu0 0
        %411 = vmatpush1.bf16.msra.mxu0 0
        %412 = vmatprep.subr.bf16.mxu0 0
        %413 = vmatpush1.bf16.msra.mxu0 0
        %414 = vmatprep.subr.bf16.mxu0 0
        %415 = vmatpush1.bf16.msra.mxu0 0
        %416 = vmatprep.subr.bf16.mxu0 0
        %417 = vmatpush1.bf16.msra.mxu0 0
        %418 = vmatprep.subr.bf16.mxu0 0
        %419 = vmatpush1.bf16.msra.mxu0 0
        %420 = vmatprep.subr.bf16.mxu0 0
        %421 = vmatpush1.bf16.msra.mxu0 0
        %422 = vmatprep.subr.bf16.mxu0 0
        %423 = vmatpush1.bf16.msra.mxu0 %v406
        %424 = vmatprep.subr.bf16.mxu0 0
        %425 = vmatpush2.bf16.msra.mxu0 0
        %426 = vmatprep.subr.bf16.mxu0 0
        %427 = vmatpush2.bf16.msra.mxu0 0
        %428 = vmatprep.subr.bf16.mxu0 0
        %429 = vmatpush2.bf16.msra.mxu0 0
        %430 = vmatprep.subr.bf16.mxu0 0
        %431 = vmatpush2.bf16.msra.mxu0 0
        %432 = vmatprep.subr.bf16.mxu0 0
        %433 = vmatpush2.bf16.msra.mxu0 0
        %434 = vmatprep.subr.bf16.mxu0 0
        %435 = vmatpush2.bf16.msra.mxu0 0
        %436 = vmatprep.subr.bf16.mxu0 0
        %437 = vmatpush2.bf16.msra.mxu0 0
        %438 = vmatprep.subr.bf16.mxu0 0
        %439 = vmatpush2.bf16.msra.mxu0 0
        %440 = vmatprep.mubr.bf16.mxu0 0
        %441 = vmatmul.mubr.bf16.gmra.mxu0 %v402
        %v442 = vpop.f32.mrf.mxu0
        %v443 = vadd.f32 %v204, %v442
        %v444 = vpop.f32.mrf.mxu0
        %v445 = vpop.f32.mrf.mxu0
        %v446 = vpop.f32.mrf.mxu0
        %447 = vdwg.mxu0
        %448 = vrot.lane.b32.xlu0 %v275, 64
        %v449 = vpop.permute.xlu0 %448
        %v451 = vsel %vm374, %v398, 0
        %v454 = vsel %vm404, %v449, 0
        %456 = vmatprep.subr.bf16.mxu0 0
        %457 = vmatpush1.bf16.msra.mxu0 0
        %458 = vmatprep.subr.bf16.mxu0 0
        %459 = vmatpush1.bf16.msra.mxu0 0
        %460 = vmatprep.subr.bf16.mxu0 0
        %461 = vmatpush1.bf16.msra.mxu0 0
        %462 = vmatprep.subr.bf16.mxu0 0
        %463 = vmatpush1.bf16.msra.mxu0 0
        %464 = vmatprep.subr.bf16.mxu0 0
        %465 = vmatpush1.bf16.msra.mxu0 0
        %466 = vmatprep.subr.bf16.mxu0 0
        %467 = vmatpush1.bf16.msra.mxu0 0
        %468 = vmatprep.subr.bf16.mxu0 0
        %469 = vmatpush1.bf16.msra.mxu0 0
        %470 = vmatprep.subr.bf16.mxu0 0
        %471 = vmatpush1.bf16.msra.mxu0 %v454
        %472 = vmatprep.subr.bf16.mxu0 0
        %473 = vmatpush2.bf16.msra.mxu0 0
        %474 = vmatprep.subr.bf16.mxu0 0
        %475 = vmatpush2.bf16.msra.mxu0 0
        %476 = vmatprep.subr.bf16.mxu0 0
        %477 = vmatpush2.bf16.msra.mxu0 0
        %478 = vmatprep.subr.bf16.mxu0 0
        %479 = vmatpush2.bf16.msra.mxu0 0
        %480 = vmatprep.subr.bf16.mxu0 0
        %481 = vmatpush2.bf16.msra.mxu0 0
        %482 = vmatprep.subr.bf16.mxu0 0
        %483 = vmatpush2.bf16.msra.mxu0 0
        %484 = vmatprep.subr.bf16.mxu0 0
        %485 = vmatpush2.bf16.msra.mxu0 0
        %486 = vmatprep.subr.bf16.mxu0 0
        %487 = vmatpush2.bf16.msra.mxu0 0
        %488 = vmatprep.mubr.bf16.mxu0 0
        %489 = vmatmul.mubr.bf16.gmra.mxu0 %v451
        %v490 = vpop.f32.mrf.mxu0
        %v491 = vadd.f32 %v205, %v490
        %v492 = vpop.f32.mrf.mxu0
        %v493 = vpop.f32.mrf.mxu0
        %v494 = vpop.f32.mrf.mxu0
        %495 = vdwg.mxu0
        %v496 = vmul.f32 %v443, %v443
        %v497 = vmul.f32 %v491, %v491
        %v498 = vsel %vm223, %v496, 0.0
        %499 = vadd.xlane.f32.xlu0 %v498
        %v500 = vpop.xlane.xlu0 %499
        %v501 = vsel %vm223, %v497, 0.0
        %502 = vadd.xlane.f32.xlu0 %v501
        %v503 = vpop.xlane.xlu0 %502
        %v504 = vrsqrt.pop %v500
        %v505 = vrsqrt.pop %v503
        %v506 = vmul.f32 %v443, %v504
        %v507 = vmul.f32 %v491, %v505
        %508 = vst.msk [vmem:[#allocation2] sm:$0xff] %vm223, %v506
        %509 = vst.msk [vmem:[#allocation2 + $0x8] sm:$0xff] %vm223, %v507
        %p510 = scmp.eq.s32.totalorder %s25, 2
        // Predicated region
        $region41: #{tpu_custom_call.1} parent=27 // pred_check
          %p511 = pneg %p510
        $region42: #{tpu_custom_call.1} parent=27 // pred_check_branch
          %513 = sbr.rel (%p511) target = $region44
        $region43: #{tpu_custom_call.1} parent=27 // pred_region
          %514 = vst.msk [vmem:[#allocation10] sm:$0xff] %vm223, %v506
          %515 = vst.msk [vmem:[#allocation10 + $0x8] sm:$0xff] %vm223, %v507
        $region44: #{tpu_custom_call.1} parent=27 // pred_fallthru
          _
        // Predicated region
        $region45: #{tpu_custom_call.1} parent=27 // pred_check
          %p516 = pneg %p102
        $region46: #{tpu_custom_call.1} parent=27 // pred_check_branch
          %518 = sbr.rel (%p516) target = $region48
        $region47: #{tpu_custom_call.1} parent=27 // pred_region
          %s519 = smul.u32 2, %s24
          %s521 = ssub.s32 256, 256
          %522 = vsyncadd [#allocation7], %s521
          %s523 = smul.addr %s519, 128
          %s524 = scalar_lea.hbm %s3, %s523
          %s525 = sshll.u32 [#allocation10], 4
          %s526 = int_to_ptr.vmem [resolvable:$true] %s525
          %531 = dma.vmem_to_hbm [thread:$0]  %s526, 256, %s524, [#allocation7], 128, 128, 8
        $region48: #{tpu_custom_call.1} parent=27 // pred_fallthru
          _
        // Predicated region
        $region49: #{tpu_custom_call.1} parent=27 // pred_check
          %p532 = pneg %p102
        $region50: #{tpu_custom_call.1} parent=27 // pred_check_branch
          %534 = sbr.rel (%p532) target = $region52
        $region51: #{tpu_custom_call.1} parent=27 // pred_region
          %535 = dma.done [#allocation7], 256
        $region52: #{tpu_custom_call.1} parent=27 // pred_fallthru
          _
      $region28: #{tpu_custom_call.1} parent=5 // pred_fallthru
        _
      %p536 = scmp.le.s32.totalorder 2, %s15
      // Predicated region
      $region53: #{tpu_custom_call.1} parent=5 // pred_check
        %p537 = pneg %p536
      $region54: #{tpu_custom_call.1} parent=5 // pred_check_branch
        %539 = sbr.rel (%p537) target = $region56
      $region55: #{tpu_custom_call.1} parent=5 // pred_region
        %s540 = ssub.s32 %s15, 2
      $region56: #{tpu_custom_call.1} parent=5 // pred_fallthru
        _
    $region6: #{tpu_custom_call.1} parent=1 // loop_footer
      %s19 = sadd.s32 1, %s15
    $region7: #{tpu_custom_call.1} parent=1 // loop_footer_branch
      %14 = sbr.rel target = $region3
    $region8: #{tpu_custom_call.1} parent=1 // loop_exit
      _
    %541 = vsyncpa [#allocation6], 1
    %s542 = scalar_lea.sflag [#allocation6], 1
    %543 = vsyncpa %s542, 1
    %544 = vsyncpa [#allocation9], 1
    %s545 = scalar_lea.sflag [#allocation9], 1
    %546 = vsyncpa %s545, 1
    %547 = vsyncpa [#allocation7], 1
    %s548 = scalar_lea.sflag [#allocation7], 1
    %549 = vsyncpa %s548, 1

</llo_original>
